<compile_context>
chip_gen: v6e
topology: v6e:2x2x1
jax: 0.10.0
libtpu: 0.0.40
codegen_flags: <defaults>
</compile_context>

<pallas_src>
import jax
import jax.numpy as jnp
from jax.experimental import pallas as pl
from jax.experimental.pallas import tpu as pltpu

HIDDEN = 256


def critic_kernel(x_ref, w1_ref, b1_ref, w2_ref, b2_ref, w3_ref, b3_ref, o_ref):
    # fc1: single bf16 MXU matmul over the concatenated [state, action] tile,
    # f32 accumulate; bias + ReLU + bf16 recast fused into one pass.
    h1 = jnp.dot(x_ref[...], w1_ref[...], preferred_element_type=jnp.float32)
    h1 = jnp.maximum(h1 + b1_ref[...], 0.0).astype(jnp.bfloat16)   # (tb, 256)

    # fc2 + bias + ReLU (f32 elementwise path -- correct on v5e too).
    h2 = jnp.dot(h1, w2_ref[...], preferred_element_type=jnp.float32)
    h2 = jnp.maximum(h2 + b2_ref[...], 0.0)                         # (tb, 256)

    # fc3 (out_features=1): lane reduction instead of a wasted MXU pass.
    # Emit as a lane-dense (1, tb) row -> unmasked full-lane stores.
    q = jnp.sum(h2 * w3_ref[...], axis=-1) + b3_ref[0, 0]           # (tb,)
    o_ref[...] = q.reshape(1, -1).astype(o_ref.dtype)               # (1, tb)


def _pick_batch_tile(batch):
    # Largest MXU-friendly tile that still yields >= 2 grid steps (v7x: both
    # TensorCores busy, pipelining alive).  Tiny batches run as one block.
    for tb in (1024, 512, 256, 128):
        if batch >= 2 * tb:
            return tb
    if batch > 128:
        return 128
    # Tiny batch: single block, rounded up to a sublane multiple of 8.
    return max(8, ((batch + 7) // 8) * 8)


def critic_forward(state, action, params, *, batch_tile=None):
    """Pallas implementation of Critic.forward(state, action) -> (B, 1)."""
    w1, b1, w2, b2, w3, b3 = params
    B = state.shape[0]
    d_in = state.shape[1] + action.shape[1]

    # Host-side prep: one concatenated bf16 activation (single fc1 matmul,
    # half the input DMA), bf16 big weights, f32 biases, lane-major fc3 row,
    # b3 as an SMEM scalar.
    x = jnp.concatenate([state, action], axis=1).astype(jnp.bfloat16)
    w1b = w1.astype(jnp.bfloat16)
    w2b = w2.astype(jnp.bfloat16)
    b1r = b1.reshape(1, HIDDEN).astype(jnp.float32)
    b2r = b2.reshape(1, HIDDEN).astype(jnp.float32)
    w3_row = w3.reshape(1, HIDDEN).astype(jnp.float32)
    b3_s = b3.reshape(1, 1).astype(jnp.float32)

    tb = batch_tile if batch_tile is not None else _pick_batch_tile(B)
    num_blocks = pl.cdiv(B, tb)
    padded_b = num_blocks * tb
    if padded_b != B:
        x = jnp.pad(x, ((0, padded_b - B), (0, 0)))

    def fixed(shape):       # weights / biases stay VMEM-resident across steps
        return pl.BlockSpec(shape, lambda i: (0, 0))

    q_rows = pl.pallas_call(
        critic_kernel,
        out_shape=jax.ShapeDtypeStruct((num_blocks, tb), jnp.float32),
        grid=(num_blocks,),
        in_specs=[
            pl.BlockSpec((tb, d_in), lambda i: (i, 0)),          # x tile
            fixed((d_in, HIDDEN)),                               # w1 (bf16)
            fixed((1, HIDDEN)),                                  # b1
            fixed((HIDDEN, HIDDEN)),                             # w2 (bf16)
            fixed((1, HIDDEN)),                                  # b2
            fixed((1, HIDDEN)),                                  # w3 row
            pl.BlockSpec(memory_space=pltpu.MemorySpace.SMEM),   # b3 scalar
        ],
        out_specs=pl.BlockSpec((1, tb), lambda i: (i, 0)),       # lane-dense Q
        compiler_params=pltpu.CompilerParams(
            dimension_semantics=("parallel",)),                  # v7x: 2 TCs
    )(x, w1b, b1r, w2b, b2r, w3_row, b3_s)

    return q_rows.reshape(padded_b, 1)[:B]


def init_critic_params(key, state_dim, action_dim, hidden=HIDDEN):
    """Deterministic synthetic parameter init (shapes match nn.Linear layers,
    weights stored (in_features, out_features))."""
    d_in = state_dim + action_dim
    k1, k2, k3 = jax.random.split(key, 3)

    def dense(k, fan_in, fan_out):
        bound = 1.0 / jnp.sqrt(fan_in)
        kw, kb = jax.random.split(k)
        w = jax.random.uniform(kw, (fan_in, fan_out), jnp.float32, -bound, bound)
        b = jax.random.uniform(kb, (1, fan_out), jnp.float32, -bound, bound)
        return w, b

    w1, b1 = dense(k1, d_in, hidden)      # fc1: (state_dim+action_dim) -> 256
    w2, b2 = dense(k2, hidden, hidden)    # fc2: 256 -> 256
    w3, b3 = dense(k3, hidden, 1)         # fc3: 256 -> 1
    return (w1, b1, w2, b2, w3, b3)


def critic_ref(state, action, params):
    """Pure-JAX f32 reference (matches the PyTorch module)."""
    w1, b1, w2, b2, w3, b3 = params
    x = jnp.concatenate([state, action], axis=1)
    h1 = jnp.maximum(x @ w1 + b1, 0.0)
    h2 = jnp.maximum(h1 @ w2 + b2, 0.0)
    return h2 @ w3 + b3


if __name__ == "__main__":
    key = jax.random.PRNGKey(0)
    k_params, k_state, k_action = jax.random.split(key, 3)

    batch = 8
    state_dim = 16
    action_dim = 4

    params = init_critic_params(k_params, state_dim, action_dim)
    state = jax.random.normal(k_state, (batch, state_dim), jnp.float32)
    action = jax.random.normal(k_action, (batch, action_dim), jnp.float32)

    q = jax.block_until_ready(critic_forward(state, action, params))
    q_ref = critic_ref(state, action, params)

    assert q.shape == (batch, 1)
    # bf16 MXU operands -> looser tolerance vs the pure-f32 reference.
    assert jnp.allclose(q, q_ref, atol=3e-2, rtol=3e-2), "mismatch vs JAX reference"

    print("KERNEL_OK")
</pallas_src>

<mosaic_0001>
module attributes {stable_mosaic.version = 11 : i64} {
  func.func @critic_kernel(%arg0: i32, %arg1: memref<8x20xbf16, #tpu.memory_space<vmem>>, %arg2: memref<20x256xbf16, #tpu.memory_space<vmem>>, %arg3: memref<1x256xf32, #tpu.memory_space<vmem>>, %arg4: memref<256x256xbf16, #tpu.memory_space<vmem>>, %arg5: memref<1x256xf32, #tpu.memory_space<vmem>>, %arg6: memref<1x256xf32, #tpu.memory_space<vmem>>, %arg7: memref<1x1xf32, #tpu.memory_space<smem>>, %arg8: memref<1x8xf32, #tpu.memory_space<vmem>>) attributes {dimension_semantics = [#tpu.dimension_semantics<parallel>], iteration_bounds = array<i64: 1>, scalar_prefetch = 0 : i64, scratch_operands = 0 : i64, tpu.core_type = #tpu.core_type<tc>, window_params = [{transform_indices = @transform_0, window_bounds = array<i64: 8, 20>}, {pipeline_mode = #tpu.pipeline_mode<synchronous>, transform_indices = @transform_1, window_bounds = array<i64: 20, 256>}, {pipeline_mode = #tpu.pipeline_mode<synchronous>, transform_indices = @transform_2, window_bounds = array<i64: 1, 256>}, {pipeline_mode = #tpu.pipeline_mode<synchronous>, transform_indices = @transform_3, window_bounds = array<i64: 256, 256>}, {pipeline_mode = #tpu.pipeline_mode<synchronous>, transform_indices = @transform_4, window_bounds = array<i64: 1, 256>}, {pipeline_mode = #tpu.pipeline_mode<synchronous>, transform_indices = @transform_5, window_bounds = array<i64: 1, 256>}, {transform_indices = @transform_6, window_bounds = array<i64: 1, 1>}, {transform_indices = @transform_7, window_bounds = array<i64: 1, 8>}]} {
    %c0 = arith.constant 0 : index
    %c0_0 = arith.constant 0 : index
    %0 = vector.load %arg1[%c0, %c0_0] : memref<8x20xbf16, #tpu.memory_space<vmem>>, vector<8x20xbf16>
    %c0_1 = arith.constant 0 : index
    %c0_2 = arith.constant 0 : index
    %1 = vector.load %arg2[%c0_1, %c0_2] : memref<20x256xbf16, #tpu.memory_space<vmem>>, vector<20x256xbf16>
    %cst = arith.constant dense<0.000000e+00> : vector<8x256xf32>
    %2 = tpu.matmul %0, %1, %cst {dimension_numbers = #tpu.dot_dimension_numbers<[1], [0], [0], [1], [0, 0, 1, 1], [], []>} : vector<8x20xbf16>, vector<20x256xbf16>, vector<8x256xf32> -> vector<8x256xf32>
    %c0_3 = arith.constant 0 : index
    %c0_4 = arith.constant 0 : index
    %3 = vector.load %arg3[%c0_3, %c0_4] : memref<1x256xf32, #tpu.memory_space<vmem>>, vector<1x256xf32>
    %4 = vector.broadcast %3 : vector<1x256xf32> to vector<8x256xf32>
    %5 = arith.addf %2, %4 : vector<8x256xf32>
    %cst_5 = arith.constant 0.000000e+00 : f32
    %6 = vector.broadcast %cst_5 : f32 to vector<8x256xf32>
    %7 = arith.maximumf %5, %6 : vector<8x256xf32>
    %8 = arith.truncf %7 : vector<8x256xf32> to vector<8x256xbf16>
    %c0_6 = arith.constant 0 : index
    %c0_7 = arith.constant 0 : index
    %9 = vector.load %arg4[%c0_6, %c0_7] : memref<256x256xbf16, #tpu.memory_space<vmem>>, vector<256x256xbf16>
    %cst_8 = arith.constant dense<0.000000e+00> : vector<8x256xf32>
    %10 = tpu.matmul %8, %9, %cst_8 {dimension_numbers = #tpu.dot_dimension_numbers<[1], [0], [0], [1], [0, 0, 1, 1], [], []>} : vector<8x256xbf16>, vector<256x256xbf16>, vector<8x256xf32> -> vector<8x256xf32>
    %c0_9 = arith.constant 0 : index
    %c0_10 = arith.constant 0 : index
    %11 = vector.load %arg5[%c0_9, %c0_10] : memref<1x256xf32, #tpu.memory_space<vmem>>, vector<1x256xf32>
    %12 = vector.broadcast %11 : vector<1x256xf32> to vector<8x256xf32>
    %13 = arith.addf %10, %12 : vector<8x256xf32>
    %cst_11 = arith.constant 0.000000e+00 : f32
    %14 = vector.broadcast %cst_11 : f32 to vector<8x256xf32>
    %15 = arith.maximumf %13, %14 : vector<8x256xf32>
    %c0_12 = arith.constant 0 : index
    %c0_13 = arith.constant 0 : index
    %16 = vector.load %arg6[%c0_12, %c0_13] : memref<1x256xf32, #tpu.memory_space<vmem>>, vector<1x256xf32>
    %17 = vector.broadcast %16 : vector<1x256xf32> to vector<8x256xf32>
    %18 = arith.mulf %15, %17 : vector<8x256xf32>
    %cst_14 = arith.constant dense<0.000000e+00> : vector<8xf32>
    %19 = vector.multi_reduction <add>, %18, %cst_14 [1] : vector<8x256xf32> to vector<8xf32>
    %c0_15 = arith.constant 0 : index
    %c0_16 = arith.constant 0 : index
    %20 = memref.load %arg7[%c0_15, %c0_16] : memref<1x1xf32, #tpu.memory_space<smem>>
    %21 = vector.broadcast %20 : f32 to vector<8xf32>
    %22 = arith.addf %19, %21 : vector<8xf32>
    %23 = vector.shape_cast %22 : vector<8xf32> to vector<1x8xf32>
    %c0_17 = arith.constant 0 : index
    %c0_18 = arith.constant 0 : index
    %24 = vector.load %arg8[%c0_17, %c0_18] : memref<1x8xf32, #tpu.memory_space<vmem>>, vector<1x8xf32>
    tpu.vector_store %arg8[%c0_17, %c0_18], %23 {strides = array<i32>} : memref<1x8xf32, #tpu.memory_space<vmem>>, vector<1x8xf32>,
    return
  }
  func.func @transform_0(%arg0: i32) -> (i32, i32) {
    %c0_i32 = arith.constant 0 : i32
    %c0_i32_0 = arith.constant 0 : i32
    return %arg0, %c0_i32 : i32, i32
  }
  func.func @transform_1(%arg0: i32) -> (i32, i32) {
    %c0_i32 = arith.constant 0 : i32
    %c0_i32_0 = arith.constant 0 : i32
    %c0_i32_1 = arith.constant 0 : i32
    return %c0_i32, %c0_i32_0 : i32, i32
  }
  func.func @transform_2(%arg0: i32) -> (i32, i32) {
    %c0_i32 = arith.constant 0 : i32
    %c0_i32_0 = arith.constant 0 : i32
    %c0_i32_1 = arith.constant 0 : i32
    return %c0_i32, %c0_i32_0 : i32, i32
  }
  func.func @transform_3(%arg0: i32) -> (i32, i32) {
    %c0_i32 = arith.constant 0 : i32
    %c0_i32_0 = arith.constant 0 : i32
    %c0_i32_1 = arith.constant 0 : i32
    return %c0_i32, %c0_i32_0 : i32, i32
  }
  func.func @transform_4(%arg0: i32) -> (i32, i32) {
    %c0_i32 = arith.constant 0 : i32
    %c0_i32_0 = arith.constant 0 : i32
    %c0_i32_1 = arith.constant 0 : i32
    return %c0_i32, %c0_i32_0 : i32, i32
  }
  func.func @transform_5(%arg0: i32) -> (i32, i32) {
    %c0_i32 = arith.constant 0 : i32
    %c0_i32_0 = arith.constant 0 : i32
    %c0_i32_1 = arith.constant 0 : i32
    return %c0_i32, %c0_i32_0 : i32, i32
  }
  func.func @transform_6(%arg0: i32) -> (i32, i32) {
    %c0_i32 = arith.constant 0 : i32
    %c0_i32_0 = arith.constant 0 : i32
    %c0_i32_1 = arith.constant 0 : i32
    return %c0_i32, %c0_i32_0 : i32, i32
  }
  func.func @transform_7(%arg0: i32) -> (i32, i32) {
    %c0_i32 = arith.constant 0 : i32
    %c0_i32_0 = arith.constant 0 : i32
    return %arg0, %c0_i32 : i32, i32
  }
}

</mosaic_0001>

<llo_original>
// kernel: tpu_custom_call.1
$region0: #{tpu_custom_call.1}
  #allocation0 [shape = 'u32[]', space=smem, size = 0x4, offset = 0x4, fixed_abs, tag = 'smem constant byte address 0x4 - core index']
  #allocation1 [shape = 'u32[144,128]{1,0:T(1,128)}', space=vmem, size = 0x12000, scoped, tag = 'internal scratch']
  #allocation2 [shape = 'f32[1,1]{1,0:T(1,128)S(6)}', space=smem, size = 0x200, scoped, tag = 'scoped memory for tpu_custom_call.1']
  %s0 = inlined_call_operand.hbm [shape: bf16[8,20], index: 0, kind: input, shape index: {}]
  %s1 = inlined_call_operand.hbm [shape: bf16[20,256], index: 1, kind: input, shape index: {}]
  %s2 = inlined_call_operand.vmem [shape: f32[1,256], index: 2, kind: input, shape index: {}]
  %s3 = inlined_call_operand.hbm [shape: bf16[256,256], index: 3, kind: input, shape index: {}]
  %s4 = inlined_call_operand.vmem [shape: f32[1,256], index: 4, kind: input, shape index: {}]
  %s5 = inlined_call_operand.vmem [shape: f32[1,256], index: 5, kind: input, shape index: {}]
  %s6 = inlined_call_operand.<no memory space> [shape: f32[1,1], index: 6, kind: input, shape index: {}]
  %s7 = inlined_call_operand.hbm [shape: f32[1,8], index: 7, kind: output, shape index: {}]
  %s8 = sld [smem:[#allocation0]]
  $region50: #{tpu_custom_call.1} parent=0
    _
  %s10 = ssub.s32 1, %s8
  %s11 = scalar_select 0, %s10, %s8
  %12 = sst [smem:[#allocation2]] %s6
  $region1: #{tpu_custom_call.1} parent=0
    #allocation3 [shape = 'u8[2048]{0}', space=vmem, size = 0x800, scoped, tag = 'input window, operand 0, single buffered']
    #allocation4 [shape = 's32[1]{0}', space=sflag, size = 0x4, scoped, tag = 'scoped memory for tpu_custom_call.1']
    #allocation5 [shape = 's32[1]{0}', space=sflag, size = 0x4, scoped, tag = 'scoped memory for tpu_custom_call.1']
    #allocation6 [shape = 'u8[12288]{0}', space=vmem, size = 0x3000, scoped, tag = 'input window, operand 1, single buffered']
    #allocation7 [shape = 's32[1]{0}', space=sflag, size = 0x4, scoped, tag = 'scoped memory for tpu_custom_call.1']
    #allocation8 [shape = 'u8[131072]{0}', space=vmem, size = 0x20000, scoped, tag = 'input window, operand 3, single buffered']
    #allocation9 [shape = 'u8[512]{0}', space=vmem, size = 0x400, scoped, tag = 'output window, operand 0, single buffered']
    %13 = vsyncpa [#allocation4], 0
    %14 = vsyncpa [#allocation7], 0
    %15 = vsyncpa [#allocation5], 0
    // Predicated region
    $region2: #{tpu_custom_call.1} parent=1 // pred_check
      _
    $region3: #{tpu_custom_call.1} parent=1 // pred_check_branch
      %17 = sbr.rel (0) target = $region5
    $region4: #{tpu_custom_call.1} parent=1 // pred_region
      %s19 = ssub.s32 64, 64
      %20 = vsyncadd [#allocation4], %s19
      %s22 = sshll.u32 [#allocation3], 4
      %s23 = int_to_ptr.vmem [resolvable:$true] %s22
      %25 = dma.hbm_to_vmem [thread:$0]  %s0, 64, %s23, [#allocation4]
    $region5: #{tpu_custom_call.1} parent=1 // pred_fallthru
      _
    // Predicated region
    $region6: #{tpu_custom_call.1} parent=1 // pred_check
      _
    $region7: #{tpu_custom_call.1} parent=1 // pred_check_branch
      %27 = sbr.rel (0) target = $region9
    $region8: #{tpu_custom_call.1} parent=1 // pred_region
      %s29 = ssub.s32 384, 384
      %30 = vsyncadd [#allocation7], %s29
      %s31 = sshll.u32 [#allocation6], 4
      %s32 = int_to_ptr.vmem [resolvable:$true] %s31
      %37 = dma.hbm_to_vmem [thread:$0]  %s1, 384, %s32, [#allocation7], 128, 128, 8
    $region9: #{tpu_custom_call.1} parent=1 // pred_fallthru
      _
    // Predicated region
    $region10: #{tpu_custom_call.1} parent=1 // pred_check
      _
    $region11: #{tpu_custom_call.1} parent=1 // pred_check_branch
      %39 = sbr.rel (0) target = $region13
    $region12: #{tpu_custom_call.1} parent=1 // pred_region
      _
    $region13: #{tpu_custom_call.1} parent=1 // pred_fallthru
      _
    // Predicated region
    $region14: #{tpu_custom_call.1} parent=1 // pred_check
      _
    $region15: #{tpu_custom_call.1} parent=1 // pred_check_branch
      %41 = sbr.rel (0) target = $region17
    $region16: #{tpu_custom_call.1} parent=1 // pred_region
      %s43 = ssub.s32 4096, 4096
      %44 = vsyncadd [#allocation7], %s43
      %s45 = sshll.u32 [#allocation8], 4
      %s46 = int_to_ptr.vmem [resolvable:$true] %s45
      %51 = dma.hbm_to_vmem [thread:$0]  %s3, 4096, %s46, [#allocation7], 128, 128, 8
    $region17: #{tpu_custom_call.1} parent=1 // pred_fallthru
      _
    // Predicated region
    $region18: #{tpu_custom_call.1} parent=1 // pred_check
      _
    $region19: #{tpu_custom_call.1} parent=1 // pred_check_branch
      %53 = sbr.rel (0) target = $region21
    $region20: #{tpu_custom_call.1} parent=1 // pred_region
      _
    $region21: #{tpu_custom_call.1} parent=1 // pred_fallthru
      _
    // Predicated region
    $region22: #{tpu_custom_call.1} parent=1 // pred_check
      _
    $region23: #{tpu_custom_call.1} parent=1 // pred_check_branch
      %55 = sbr.rel (0) target = $region25
    $region24: #{tpu_custom_call.1} parent=1 // pred_region
      _
    $region25: #{tpu_custom_call.1} parent=1 // pred_fallthru
      _
    // Predicated region
    $region26: #{tpu_custom_call.1} parent=1 // pred_check
      _
    $region27: #{tpu_custom_call.1} parent=1 // pred_check_branch
      %57 = sbr.rel (0) target = $region29
    $region28: #{tpu_custom_call.1} parent=1 // pred_region
      _
    $region29: #{tpu_custom_call.1} parent=1 // pred_fallthru
      _
    // Predicated region
    $region30: #{tpu_custom_call.1} parent=1 // pred_check
      _
    $region31: #{tpu_custom_call.1} parent=1 // pred_check_branch
      %59 = sbr.rel (0) target = $region33
    $region32: #{tpu_custom_call.1} parent=1 // pred_region
      %60 = dma.done [#allocation4], 64
    $region33: #{tpu_custom_call.1} parent=1 // pred_fallthru
      _
    // Predicated region
    $region34: #{tpu_custom_call.1} parent=1 // pred_check
      _
    $region35: #{tpu_custom_call.1} parent=1 // pred_check_branch
      %62 = sbr.rel (0) target = $region37
    $region36: #{tpu_custom_call.1} parent=1 // pred_region
      %63 = dma.done [#allocation7], 384
    $region37: #{tpu_custom_call.1} parent=1 // pred_fallthru
      _
    // Predicated region
    $region38: #{tpu_custom_call.1} parent=1 // pred_check
      _
    $region39: #{tpu_custom_call.1} parent=1 // pred_check_branch
      %65 = sbr.rel (0) target = $region41
    $region40: #{tpu_custom_call.1} parent=1 // pred_region
      %66 = dma.done [#allocation7], 4096
    $region41: #{tpu_custom_call.1} parent=1 // pred_fallthru
      _
    %v68 = vld [vmem:[#allocation3] sm:$0xf]
    %v69 = vld [vmem:[#allocation6] sm:$0xff]
    %v70 = vld [vmem:[#allocation6 + $0x8] sm:$0xff]
    %v71 = vld [vmem:[#allocation6 + $0x10] sm:$0x33]
    %v72 = vld [vmem:[%s2] sm:$0x3]
    %v74 = vlaneseq
    %v75 = vshrl.u32 %v74, 7
    %v76 = vsub.s32 0, %v75
    %v77 = vrot.slane %v72, %v76
    %v78 = vlaneseq
    %v79 = vshrl.u32 %v78, 7
    %v80 = vsub.s32 1, %v79
    %v81 = vrot.slane %v72, %v80
    %v87 = vunpack.c.l.b16 %v69
    %v88 = vunpack.c.h.b16 %v69
    %v89 = vunpack.c.l.b16 %v70
    %v90 = vunpack.c.h.b16 %v70
    %v91 = vunpack.c.l.b16 %v71
    %v92 = vunpack.c.h.b16 %v71
    %v93 = vpack.c.b16 %v89, %v87
    %v94 = vpack.c.b16 %v90, %v88
    %v95 = vpack.c.b16 %v91, %v91
    %v96 = vpack.c.b16 %v92, %v92
    %vm99 = vcmask 162816
    %v101 = vsel %vm99, %v68, 0
    %vm103 = vcmask 1041408
    %v105 = vsel %vm103, %v95, 0
    %v108 = vsel %vm103, %v96, 0
    %110 = vmatprep.subr.bf16.mxu0 0
    %111 = vmatpush1.bf16.msra.mxu0 0
    %112 = vmatprep.subr.bf16.mxu0 0
    %113 = vmatpush1.bf16.msra.mxu0 0
    %114 = vmatprep.subr.bf16.mxu0 0
    %115 = vmatpush1.bf16.msra.mxu0 0
    %116 = vmatprep.subr.bf16.mxu0 0
    %117 = vmatpush1.bf16.msra.mxu0 0
    %118 = vmatprep.subr.bf16.mxu0 0
    %119 = vmatpush1.bf16.msra.mxu0 0
    %120 = vmatprep.subr.bf16.mxu0 0
    %121 = vmatpush1.bf16.msra.mxu0 0
    %122 = vmatprep.subr.bf16.mxu0 %v108
    %123 = vmatpush1.bf16.msra.mxu0 %v105
    %124 = vmatprep.subr.bf16.mxu0 %v94
    %125 = vmatpush1.bf16.msra.mxu0 %v93
    %126 = vmatprep.subr.bf16.mxu0 0
    %127 = vmatpush2.bf16.msra.mxu0 0
    %128 = vmatprep.subr.bf16.mxu0 0
    %129 = vmatpush2.bf16.msra.mxu0 0
    %130 = vmatprep.subr.bf16.mxu0 0
    %131 = vmatpush2.bf16.msra.mxu0 0
    %132 = vmatprep.subr.bf16.mxu0 0
    %133 = vmatpush2.bf16.msra.mxu0 0
    %134 = vmatprep.subr.bf16.mxu0 0
    %135 = vmatpush2.bf16.msra.mxu0 0
    %136 = vmatprep.subr.bf16.mxu0 0
    %137 = vmatpush2.bf16.msra.mxu0 0
    %138 = vmatprep.subr.bf16.mxu0 0
    %139 = vmatpush2.bf16.msra.mxu0 0
    %140 = vmatprep.subr.bf16.mxu0 0
    %141 = vmatpush2.bf16.msra.mxu0 0
    %142 = vmatprep.mubr.bf16.mxu0 0
    %143 = vmatmul.mubr.bf16.gmra.mxu0 %v101
    %v144 = vpop.f32.mrf.mxu0
    %v145 = vadd.f32 %v77, %v144
    %v146 = vpop.f32.mrf.mxu0
    %v147 = vadd.f32 %v81, %v146
    %v148 = vpop.f32.mrf.mxu0
    %v149 = vpop.f32.mrf.mxu0
    %150 = vdwg.mxu0
    %v151 = vmax.f32 %v145, 0.0
    %v152 = vmax.f32 %v147, 0.0
    %v153 = vpack.c.bf16 %v151, %v151
    %v154 = vpack.c.bf16 %v152, %v152
    %v155 = vld [vmem:[#allocation8] sm:$0xff]
    %v156 = vld [vmem:[#allocation8 + $0x8] sm:$0xff]
    %v157 = vld [vmem:[#allocation8 + $0x10] sm:$0xff]
    %v158 = vld [vmem:[#allocation8 + $0x18] sm:$0xff]
    %v159 = vld [vmem:[#allocation8 + $0x20] sm:$0xff]
    %v160 = vld [vmem:[#allocation8 + $0x28] sm:$0xff]
    %v161 = vld [vmem:[#allocation8 + $0x30] sm:$0xff]
    %v162 = vld [vmem:[#allocation8 + $0x38] sm:$0xff]
    %v163 = vld [vmem:[#allocation8 + $0x40] sm:$0xff]
    %v164 = vld [vmem:[#allocation8 + $0x48] sm:$0xff]
    %v165 = vld [vmem:[#allocation8 + $0x50] sm:$0xff]
    %v166 = vld [vmem:[#allocation8 + $0x58] sm:$0xff]
    %v167 = vld [vmem:[#allocation8 + $0x60] sm:$0xff]
    %v168 = vld [vmem:[#allocation8 + $0x68] sm:$0xff]
    %v169 = vld [vmem:[#allocation8 + $0x70] sm:$0xff]
    %v170 = vld [vmem:[#allocation8 + $0x78] sm:$0xff]
    %v171 = vld [vmem:[#allocation8 + $0x80] sm:$0xff]
    %v172 = vld [vmem:[#allocation8 + $0x88] sm:$0xff]
    %v173 = vld [vmem:[#allocation8 + $0x90] sm:$0xff]
    %v174 = vld [vmem:[#allocation8 + $0x98] sm:$0xff]
    %v175 = vld [vmem:[#allocation8 + $0xa0] sm:$0xff]
    %v176 = vld [vmem:[#allocation8 + $0xa8] sm:$0xff]
    %v177 = vld [vmem:[#allocation8 + $0xb0] sm:$0xff]
    %v178 = vld [vmem:[#allocation8 + $0xb8] sm:$0xff]
    %v179 = vld [vmem:[#allocation8 + $0xc0] sm:$0xff]
    %v180 = vld [vmem:[#allocation8 + $0xc8] sm:$0xff]
    %v181 = vld [vmem:[#allocation8 + $0xd0] sm:$0xff]
    %v182 = vld [vmem:[#allocation8 + $0xd8] sm:$0xff]
    %v183 = vld [vmem:[#allocation8 + $0xe0] sm:$0xff]
    %v184 = vld [vmem:[#allocation8 + $0xe8] sm:$0xff]
    %v185 = vld [vmem:[#allocation8 + $0xf0] sm:$0xff]
    %v186 = vld [vmem:[#allocation8 + $0xf8] sm:$0xff]
    %v187 = vld [vmem:[%s4] sm:$0x3]
    %v189 = vlaneseq
    %v190 = vshrl.u32 %v189, 7
    %v191 = vsub.s32 0, %v190
    %v192 = vrot.slane %v187, %v191
    %v193 = vlaneseq
    %v194 = vshrl.u32 %v193, 7
    %v195 = vsub.s32 1, %v194
    %v196 = vrot.slane %v187, %v195
    %v231 = vunpack.c.l.b16 %v155
    %v232 = vunpack.c.h.b16 %v155
    %v233 = vunpack.c.l.b16 %v156
    %v234 = vunpack.c.h.b16 %v156
    %v235 = vunpack.c.l.b16 %v157
    %v236 = vunpack.c.h.b16 %v157
    %v237 = vunpack.c.l.b16 %v158
    %v238 = vunpack.c.h.b16 %v158
    %v239 = vunpack.c.l.b16 %v159
    %v240 = vunpack.c.h.b16 %v159
    %v241 = vunpack.c.l.b16 %v160
    %v242 = vunpack.c.h.b16 %v160
    %v243 = vunpack.c.l.b16 %v161
    %v244 = vunpack.c.h.b16 %v161
    %v245 = vunpack.c.l.b16 %v162
    %v246 = vunpack.c.h.b16 %v162
    %v247 = vunpack.c.l.b16 %v163
    %v248 = vunpack.c.h.b16 %v163
    %v249 = vunpack.c.l.b16 %v164
    %v250 = vunpack.c.h.b16 %v164
    %v251 = vunpack.c.l.b16 %v165
    %v252 = vunpack.c.h.b16 %v165
    %v253 = vunpack.c.l.b16 %v166
    %v254 = vunpack.c.h.b16 %v166
    %v255 = vunpack.c.l.b16 %v167
    %v256 = vunpack.c.h.b16 %v167
    %v257 = vunpack.c.l.b16 %v168
    %v258 = vunpack.c.h.b16 %v168
    %v259 = vunpack.c.l.b16 %v169
    %v260 = vunpack.c.h.b16 %v169
    %v261 = vunpack.c.l.b16 %v170
    %v262 = vunpack.c.h.b16 %v170
    %v263 = vunpack.c.l.b16 %v171
    %v264 = vunpack.c.h.b16 %v171
    %v265 = vunpack.c.l.b16 %v172
    %v266 = vunpack.c.h.b16 %v172
    %v267 = vunpack.c.l.b16 %v173
    %v268 = vunpack.c.h.b16 %v173
    %v269 = vunpack.c.l.b16 %v174
    %v270 = vunpack.c.h.b16 %v174
    %v271 = vunpack.c.l.b16 %v175
    %v272 = vunpack.c.h.b16 %v175
    %v273 = vunpack.c.l.b16 %v176
    %v274 = vunpack.c.h.b16 %v176
    %v275 = vunpack.c.l.b16 %v177
    %v276 = vunpack.c.h.b16 %v177
    %v277 = vunpack.c.l.b16 %v178
    %v278 = vunpack.c.h.b16 %v178
    %v279 = vunpack.c.l.b16 %v179
    %v280 = vunpack.c.h.b16 %v179
    %v281 = vunpack.c.l.b16 %v180
    %v282 = vunpack.c.h.b16 %v180
    %v283 = vunpack.c.l.b16 %v181
    %v284 = vunpack.c.h.b16 %v181
    %v285 = vunpack.c.l.b16 %v182
    %v286 = vunpack.c.h.b16 %v182
    %v287 = vunpack.c.l.b16 %v183
    %v288 = vunpack.c.h.b16 %v183
    %v289 = vunpack.c.l.b16 %v184
    %v290 = vunpack.c.h.b16 %v184
    %v291 = vunpack.c.l.b16 %v185
    %v292 = vunpack.c.h.b16 %v185
    %v293 = vunpack.c.l.b16 %v186
    %v294 = vunpack.c.h.b16 %v186
    %v295 = vpack.c.b16 %v233, %v231
    %v296 = vpack.c.b16 %v234, %v232
    %v297 = vpack.c.b16 %v237, %v235
    %v298 = vpack.c.b16 %v238, %v236
    %v299 = vpack.c.b16 %v241, %v239
    %v300 = vpack.c.b16 %v242, %v240
    %v301 = vpack.c.b16 %v245, %v243
    %v302 = vpack.c.b16 %v246, %v244
    %v303 = vpack.c.b16 %v249, %v247
    %v304 = vpack.c.b16 %v250, %v248
    %v305 = vpack.c.b16 %v253, %v251
    %v306 = vpack.c.b16 %v254, %v252
    %v307 = vpack.c.b16 %v257, %v255
    %v308 = vpack.c.b16 %v258, %v256
    %v309 = vpack.c.b16 %v261, %v259
    %v310 = vpack.c.b16 %v262, %v260
    %v311 = vpack.c.b16 %v265, %v263
    %v312 = vpack.c.b16 %v266, %v264
    %v313 = vpack.c.b16 %v269, %v267
    %v314 = vpack.c.b16 %v270, %v268
    %v315 = vpack.c.b16 %v273, %v271
    %v316 = vpack.c.b16 %v274, %v272
    %v317 = vpack.c.b16 %v277, %v275
    %v318 = vpack.c.b16 %v278, %v276
    %v319 = vpack.c.b16 %v281, %v279
    %v320 = vpack.c.b16 %v282, %v280
    %v321 = vpack.c.b16 %v285, %v283
    %v322 = vpack.c.b16 %v286, %v284
    %v323 = vpack.c.b16 %v289, %v287
    %v324 = vpack.c.b16 %v290, %v288
    %v325 = vpack.c.b16 %v293, %v291
    %v326 = vpack.c.b16 %v294, %v292
    %359 = vmatprep.subr.bf16.mxu0 %v310
    %360 = vmatpush1.bf16.msra.mxu0 %v309
    %361 = vmatprep.subr.bf16.mxu0 %v308
    %362 = vmatpush1.bf16.msra.mxu0 %v307
    %363 = vmatprep.subr.bf16.mxu0 %v306
    %364 = vmatpush1.bf16.msra.mxu0 %v305
    %365 = vmatprep.subr.bf16.mxu0 %v304
    %366 = vmatpush1.bf16.msra.mxu0 %v303
    %367 = vmatprep.subr.bf16.mxu0 %v302
    %368 = vmatpush1.bf16.msra.mxu0 %v301
    %369 = vmatprep.subr.bf16.mxu0 %v300
    %370 = vmatpush1.bf16.msra.mxu0 %v299
    %371 = vmatprep.subr.bf16.mxu0 %v298
    %372 = vmatpush1.bf16.msra.mxu0 %v297
    %373 = vmatprep.subr.bf16.mxu0 %v296
    %374 = vmatpush1.bf16.msra.mxu0 %v295
    %375 = vmatprep.subr.bf16.mxu0 %v326
    %376 = vmatpush2.bf16.msra.mxu0 %v325
    %377 = vmatprep.subr.bf16.mxu0 %v324
    %378 = vmatpush2.bf16.msra.mxu0 %v323
    %379 = vmatprep.subr.bf16.mxu0 %v322
    %380 = vmatpush2.bf16.msra.mxu0 %v321
    %381 = vmatprep.subr.bf16.mxu0 %v320
    %382 = vmatpush2.bf16.msra.mxu0 %v319
    %383 = vmatprep.subr.bf16.mxu0 %v318
    %384 = vmatpush2.bf16.msra.mxu0 %v317
    %385 = vmatprep.subr.bf16.mxu0 %v316
    %386 = vmatpush2.bf16.msra.mxu0 %v315
    %387 = vmatprep.subr.bf16.mxu0 %v314
    %388 = vmatpush2.bf16.msra.mxu0 %v313
    %389 = vmatprep.subr.bf16.mxu0 %v312
    %390 = vmatpush2.bf16.msra.mxu0 %v311
    %391 = vmatprep.mubr.bf16.mxu0 %v154
    %392 = vmatmul.mubr.bf16.gmra.mxu0 %v153
    %v393 = vpop.f32.mrf.mxu0
    %v394 = vadd.f32 %v192, %v393
    %v395 = vpop.f32.mrf.mxu0
    %v396 = vadd.f32 %v196, %v395
    %v397 = vpop.f32.mrf.mxu0
    %v398 = vpop.f32.mrf.mxu0
    %399 = vdwg.mxu0
    %v400 = vmax.f32 %v394, 0.0
    %v401 = vmax.f32 %v396, 0.0
    %v402 = vld [vmem:[%s5] sm:$0x3]
    %v404 = vlaneseq
    %v405 = vshrl.u32 %v404, 7
    %v406 = vsub.s32 0, %v405
    %v407 = vrot.slane %v402, %v406
    %v408 = vlaneseq
    %v409 = vshrl.u32 %v408, 7
    %v410 = vsub.s32 1, %v409
    %v411 = vrot.slane %v402, %v410
    %v414 = vmul.f32 %v400, %v407
    %v415 = vmul.f32 %v401, %v411
    %v416 = vadd.f32 %v414, %v415
    %417 = vadd.xlane.f32.xlu0 %v416
    %v418 = vpop.xlane.xlu0 %417
    %s419 = sld [smem:[#allocation2]]
    %v420 = vstv %s419
    %v421 = vadd.f32 %v418, %v420
    %v423 = vlaneseq
    %v424 = vand.u32 %v423, 127
    %v425 = vlaneseq
    %v426 = vshrl.u32 %v425, 7
    %v427 = vsub.s32 %v424, %v426
    %v428 = vrot.slane %v421, %v427
    %vm430 = vcmask 57344
    %431 = vst.msk [vmem:[#allocation9] sm:$0x1] %vm430, %v428
    // Predicated region
    $region42: #{tpu_custom_call.1} parent=1 // pred_check
      _
    $region43: #{tpu_custom_call.1} parent=1 // pred_check_branch
      %433 = sbr.rel (0) target = $region45
    $region44: #{tpu_custom_call.1} parent=1 // pred_region
      %s435 = ssub.s32 16, 16
      %436 = vsyncadd [#allocation5], %s435
      %s438 = sshll.u32 [#allocation9], 4
      %s439 = int_to_ptr.vmem [resolvable:$true] %s438
      %441 = dma.vmem_to_hbm [thread:$0]  %s439, 16, %s7, [#allocation5]
    $region45: #{tpu_custom_call.1} parent=1 // pred_fallthru
      _
    // Predicated region
    $region46: #{tpu_custom_call.1} parent=1 // pred_check
      _
    $region47: #{tpu_custom_call.1} parent=1 // pred_check_branch
      %443 = sbr.rel (0) target = $region49
    $region48: #{tpu_custom_call.1} parent=1 // pred_region
      %444 = dma.done [#allocation5], 16
    $region49: #{tpu_custom_call.1} parent=1 // pred_fallthru
      _
    %445 = vsyncpa [#allocation4], 1
    %446 = vsyncpa [#allocation7], 1
    %447 = vsyncpa [#allocation5], 1

</llo_original>
